<compile_context>
chip_gen: v7x
topology: tpu7x:2x2x1
jax: 0.10.0
libtpu: 0.0.40
codegen_flags: <defaults>
</compile_context>

<pallas_src>
import functools
import math

import jax
import jax.numpy as jnp
from jax.experimental import pallas as pl
from jax.experimental.pallas import tpu as pltpu

LANES = 128      # TPU lane width: every feature dim is padded to this
SUBLANES = 8     # sublane granularity for the batch tile


def _cdiv(a, b):
    return -(-a // b)


def _activation_fn(name):
    if name == "relu":
        return lambda x: jnp.maximum(x, 0.0)
    elif name == "sigmoid":
        return jax.nn.sigmoid
    elif name == "tanh":
        return jnp.tanh
    elif name == "leaky relu":
        # TODO(synk): nn.RReLU samples a random negative slope in training mode;
        # eval-mode RReLU uses the mean slope (lower+upper)/2 = (1/8 + 1/3)/2.
        slope = (1.0 / 8.0 + 1.0 / 3.0) / 2.0
        return lambda x: jnp.where(x >= 0.0, x, slope * x)
    else:
        raise ValueError(f"unknown activation: {name}")


def _mlp_kernel(x_ref, w_ref, b_ref, out_ref, *, num_layers, activation,
                input_dim):
    """Full MLP forward for one [tb, input_dim] batch tile.

    x_ref  : [tb, input_dim]   f32  unpadded input tile
    w_ref  : [L, 128, 128]     bf16 weights, zero-padded rows & cols (resident)
    b_ref  : [L, 1, 128]       f32  biases; padded lanes of the LAST layer's
                                    bias hold -1e30 (softmax mask)
    out_ref: [tb, 128]         f32  softmax probabilities (padded lanes = 0)
    """
    act = _activation_fn(activation)

    # First layer: contract over the real input_dim rows of the resident
    # weight stack (no host-side 128-lane padding pass on x).
    x = x_ref[...].astype(w_ref.dtype)
    if input_dim % 16 == 0:
        h = jnp.dot(x, w_ref[0, :input_dim, :],
                    preferred_element_type=jnp.float32)
    else:
        # Fallback for bf16-sublane-misaligned input dims: zero-extend the
        # activation to the full 128 lanes in VMEM (MXU has plenty of slack).
        x = jnp.pad(x, ((0, 0), (0, LANES - input_dim)))
        h = jnp.dot(x, w_ref[0], preferred_element_type=jnp.float32)
    h = h + b_ref[0]
    if num_layers > 1:
        h = act(h)

    for i in range(1, num_layers):
        h = jnp.dot(h.astype(w_ref.dtype), w_ref[i],
                    preferred_element_type=jnp.float32) + b_ref[i]
        if i < num_layers - 1:
            h = act(h)

    # Softmax over the feature axis. Padded logit lanes already carry -1e30
    # via the packed last-layer bias, so exp underflows to exactly 0 there.
    m = jnp.max(h, axis=-1, keepdims=True)
    e = jnp.exp(h - m)
    denom = jnp.sum(e, axis=-1, keepdims=True)
    out_ref[...] = (e * pl.reciprocal(denom, approx=True)).astype(out_ref.dtype)


def pack_mlp_params(params, mxu_dtype=jnp.bfloat16):
    """Stack all layer weights/biases into two lane-padded arrays (done ONCE).

    Zero-padded weight ROWS guarantee that spurious activations on padded
    lanes (e.g. sigmoid(0) = 0.5) cannot leak into real outputs; the padded
    lanes of the LAST layer's bias carry -1e30 so the in-kernel softmax needs
    no explicit mask.
    """
    num_layers = len(params)
    output_dim = params[-1][0].shape[1]
    w_stack = jnp.zeros((num_layers, LANES, LANES), jnp.float32)
    b_stack = jnp.zeros((num_layers, 1, LANES), jnp.float32)
    b_stack = b_stack.at[num_layers - 1, 0, output_dim:].set(-1e30)
    for i, (w, b) in enumerate(params):
        fan_in, fan_out = w.shape
        w_stack = w_stack.at[i, :fan_in, :fan_out].set(w)
        b_stack = b_stack.at[i, :, :fan_out].set(b.reshape(1, fan_out))
    return w_stack.astype(mxu_dtype), b_stack


def _batch_tiling(batch, block_batch):
    """Pick (tile_rows, grid_steps) for the parallel batch axis.

    - Tile size derived from ceil(batch / num_tiles): avoids near-2x tail
      padding when batch is just above the block cap.
    - Batches >= 256 rows always get >= 2 grid steps so v7x's second
      TensorCore gets work (one extra ~0.35us step on v5e/v6e is noise).
    """
    padded = _cdiv(batch, SUBLANES) * SUBLANES
    num_tiles = _cdiv(padded, block_batch)
    if num_tiles == 1 and padded >= 256:
        num_tiles = 2
    tb = _cdiv(_cdiv(padded, num_tiles), SUBLANES) * SUBLANES
    grid = _cdiv(batch, tb)
    return tb, grid


@functools.partial(
    jax.jit,
    static_argnames=("num_layers", "activation", "input_dim", "output_dim",
                     "block_batch"))
def _mlp_forward_impl(x, w_stack, b_stack, *, num_layers, activation,
                      input_dim, output_dim, block_batch):
    batch = x.shape[0]
    tb, grid = _batch_tiling(batch, block_batch)

    kernel = functools.partial(
        _mlp_kernel, num_layers=num_layers, activation=activation,
        input_dim=input_dim)

    out = pl.pallas_call(
        kernel,
        out_shape=jax.ShapeDtypeStruct((batch, LANES), jnp.float32),
        grid=(grid,),
        in_specs=[
            # Unpadded x tile: last block dim equals the full array dim, so
            # the (8,128) rule is satisfied; partial tail blocks are masked.
            pl.BlockSpec((tb, input_dim), lambda i: (i, 0)),
            # Weight/bias stacks stay resident in VMEM across the whole grid.
            pl.BlockSpec((num_layers, LANES, LANES), lambda i: (0, 0, 0)),
            pl.BlockSpec((num_layers, 1, LANES), lambda i: (0, 0, 0)),
        ],
        out_specs=pl.BlockSpec((tb, LANES), lambda i: (i, 0)),
        compiler_params=pltpu.CompilerParams(
            dimension_semantics=("parallel",)),
    )(x.astype(jnp.float32), w_stack, b_stack)

    # Only the lane slice remains (rows already match batch exactly).
    return out[:, :output_dim]


class PallasMLP:
    """Packs parameters once at construction; forward is one jitted call."""

    def __init__(self, params, activation, *, mxu_dtype=jnp.bfloat16,
                 block_batch=512):
        self.num_layers = len(params)
        self.input_dim = int(params[0][0].shape[0])
        self.output_dim = int(params[-1][0].shape[1])
        self.activation = activation
        self.block_batch = block_batch
        self.w_stack, self.b_stack = pack_mlp_params(params, mxu_dtype)

    def __call__(self, x):
        return _mlp_forward_impl(
            x, self.w_stack, self.b_stack,
            num_layers=self.num_layers, activation=self.activation,
            input_dim=self.input_dim, output_dim=self.output_dim,
            block_batch=self.block_batch)


def init_mlp_params(key, input_dim, output_dim, hidden_num, hidden_size):
    """Deterministic init mimicking PyTorch's default Linear init
    (uniform(-1/sqrt(fan_in), 1/sqrt(fan_in)) for both W and b)."""
    dims = [input_dim] + [hidden_size] * hidden_num + [output_dim]
    params = []
    for i in range(len(dims) - 1):
        fan_in, fan_out = dims[i], dims[i + 1]
        key, kw, kb = jax.random.split(key, 3)
        bound = 1.0 / math.sqrt(fan_in)
        w = jax.random.uniform(
            kw, (fan_in, fan_out), jnp.float32, minval=-bound, maxval=bound)
        b = jax.random.uniform(
            kb, (1, fan_out), jnp.float32, minval=-bound, maxval=bound)
        params.append((w, b))
    return params


def mlp_reference_f32(x, params, activation):
    """Pure-JAX f32 reference (matches the PyTorch module exactly)."""
    act = _activation_fn(activation)
    h = x
    for i, (w, b) in enumerate(params):
        h = h @ w + b.reshape(1, -1)
        if i < len(params) - 1:
            h = act(h)
    return jax.nn.softmax(h, axis=1)


def mlp_reference_matched(x, params, activation, mxu_dtype=jnp.bfloat16):
    """Reference mirroring the kernel's bf16 MXU operands / f32 accumulation."""
    act = _activation_fn(activation)
    h = x.astype(jnp.float32)
    for i, (w, b) in enumerate(params):
        h = jnp.dot(h.astype(mxu_dtype), w.astype(mxu_dtype),
                    preferred_element_type=jnp.float32) + b.reshape(1, -1)
        if i < len(params) - 1:
            h = act(h)
    return jax.nn.softmax(h, axis=1)


if __name__ == "__main__":
    # Shapes consistent with the module: MLP(input_dim=16, output_dim=4,
    # hidden_num=3, hidden_size=15).
    input_dim = 16
    output_dim = 4
    hidden_num = 3          # from hidden_num = range(1, 7)
    hidden_size = 15        # from hidden_size = [5, 10, 15]

    key = jax.random.PRNGKey(0)
    key, kparams = jax.random.split(key)
    params = init_mlp_params(kparams, input_dim, output_dim, hidden_num,
                             hidden_size)

    # batch=8  : single small tile (primary test shape).
    # batch=300: exercises the 2-step parallel grid (v7x 2-TC path) and the
    #            masked partial tail block (300 rows, tb=152, grid=2).
    for batch in (8, 300):
        key, kx = jax.random.split(key)
        x = jax.random.normal(kx, (batch, input_dim), jnp.float32)

        # Check relu and sigmoid (sigmoid exercises the padded-lane leakage
        # protection: sigmoid(0)=0.5 on padded lanes must not reach outputs).
        for activation in ("relu", "sigmoid"):
            model = PallasMLP(params, activation)
            out = jax.block_until_ready(model(x))

            ref_matched = mlp_reference_matched(x, params, activation)
            ref_f32 = mlp_reference_f32(x, params, activation)

            assert out.shape == (batch, output_dim)
            assert jnp.allclose(out, ref_matched, atol=3e-3, rtol=3e-3), \
                f"batch={batch} {activation}: mismatch vs bf16-matched reference"
            assert jnp.allclose(out, ref_f32, atol=3e-2, rtol=3e-2), \
                f"batch={batch} {activation}: mismatch vs f32 reference"
            assert jnp.allclose(jnp.sum(out, axis=1), 1.0, atol=5e-3), \
                f"batch={batch} {activation}: softmax rows != 1"

    print("KERNEL_OK")
</pallas_src>

<mosaic_0001>
module attributes {stable_mosaic.version = 11 : i64} {
  func.func @_mlp_kernel(%arg0: i32, %arg1: memref<8x16xf32, #tpu.memory_space<vmem>>, %arg2: memref<4x128x128xbf16, #tpu.memory_space<vmem>>, %arg3: memref<4x1x128xf32, #tpu.memory_space<vmem>>, %arg4: memref<8x128xf32, #tpu.memory_space<vmem>>) attributes {dimension_semantics = [#tpu.dimension_semantics<parallel>], iteration_bounds = array<i64: 1>, scalar_prefetch = 0 : i64, scratch_operands = 0 : i64, tpu.core_type = #tpu.core_type<tc>, window_params = [{transform_indices = @transform_0, window_bounds = array<i64: 8, 16>}, {pipeline_mode = #tpu.pipeline_mode<synchronous>, transform_indices = @transform_1, window_bounds = array<i64: 4, 128, 128>}, {pipeline_mode = #tpu.pipeline_mode<synchronous>, transform_indices = @transform_2, window_bounds = array<i64: 4, 1, 128>}, {transform_indices = @transform_3, window_bounds = array<i64: 8, 128>}]} {
    %c0 = arith.constant 0 : index
    %c0_0 = arith.constant 0 : index
    %0 = vector.load %arg1[%c0, %c0_0] : memref<8x16xf32, #tpu.memory_space<vmem>>, vector<8x16xf32>
    %1 = arith.truncf %0 : vector<8x16xf32> to vector<8x16xbf16>
    %c0_1 = arith.constant 0 : index
    %c0_2 = arith.constant 0 : index
    %c0_3 = arith.constant 0 : index
    %2 = vector.load %arg2[%c0_1, %c0_2, %c0_3] : memref<4x128x128xbf16, #tpu.memory_space<vmem>>, vector<1x16x128xbf16>
    %3 = vector.shape_cast %2 : vector<1x16x128xbf16> to vector<16x128xbf16>
    %cst = arith.constant dense<0.000000e+00> : vector<8x128xf32>
    %4 = tpu.matmul %1, %3, %cst {dimension_numbers = #tpu.dot_dimension_numbers<[1], [0], [0], [1], [0, 0, 1, 1], [], []>} : vector<8x16xbf16>, vector<16x128xbf16>, vector<8x128xf32> -> vector<8x128xf32>
    %c0_4 = arith.constant 0 : index
    %c0_5 = arith.constant 0 : index
    %c0_6 = arith.constant 0 : index
    %5 = vector.load %arg3[%c0_4, %c0_5, %c0_6] : memref<4x1x128xf32, #tpu.memory_space<vmem>>, vector<1x1x128xf32>
    %6 = vector.shape_cast %5 : vector<1x1x128xf32> to vector<1x128xf32>
    %7 = vector.broadcast %6 : vector<1x128xf32> to vector<8x128xf32>
    %8 = arith.addf %4, %7 : vector<8x128xf32>
    %cst_7 = arith.constant 0.000000e+00 : f32
    %9 = vector.broadcast %cst_7 : f32 to vector<8x128xf32>
    %10 = arith.maximumf %8, %9 : vector<8x128xf32>
    %11 = arith.truncf %10 : vector<8x128xf32> to vector<8x128xbf16>
    %c1 = arith.constant 1 : index
    %c0_8 = arith.constant 0 : index
    %c0_9 = arith.constant 0 : index
    %12 = vector.load %arg2[%c1, %c0_8, %c0_9] : memref<4x128x128xbf16, #tpu.memory_space<vmem>>, vector<1x128x128xbf16>
    %13 = vector.shape_cast %12 : vector<1x128x128xbf16> to vector<128x128xbf16>
    %cst_10 = arith.constant dense<0.000000e+00> : vector<8x128xf32>
    %14 = tpu.matmul %11, %13, %cst_10 {dimension_numbers = #tpu.dot_dimension_numbers<[1], [0], [0], [1], [0, 0, 1, 1], [], []>} : vector<8x128xbf16>, vector<128x128xbf16>, vector<8x128xf32> -> vector<8x128xf32>
    %c1_11 = arith.constant 1 : index
    %c0_12 = arith.constant 0 : index
    %c0_13 = arith.constant 0 : index
    %15 = vector.load %arg3[%c1_11, %c0_12, %c0_13] : memref<4x1x128xf32, #tpu.memory_space<vmem>>, vector<1x1x128xf32>
    %16 = vector.shape_cast %15 : vector<1x1x128xf32> to vector<1x128xf32>
    %17 = vector.broadcast %16 : vector<1x128xf32> to vector<8x128xf32>
    %18 = arith.addf %14, %17 : vector<8x128xf32>
    %cst_14 = arith.constant 0.000000e+00 : f32
    %19 = vector.broadcast %cst_14 : f32 to vector<8x128xf32>
    %20 = arith.maximumf %18, %19 : vector<8x128xf32>
    %21 = arith.truncf %20 : vector<8x128xf32> to vector<8x128xbf16>
    %c2 = arith.constant 2 : index
    %c0_15 = arith.constant 0 : index
    %c0_16 = arith.constant 0 : index
    %22 = vector.load %arg2[%c2, %c0_15, %c0_16] : memref<4x128x128xbf16, #tpu.memory_space<vmem>>, vector<1x128x128xbf16>
    %23 = vector.shape_cast %22 : vector<1x128x128xbf16> to vector<128x128xbf16>
    %cst_17 = arith.constant dense<0.000000e+00> : vector<8x128xf32>
    %24 = tpu.matmul %21, %23, %cst_17 {dimension_numbers = #tpu.dot_dimension_numbers<[1], [0], [0], [1], [0, 0, 1, 1], [], []>} : vector<8x128xbf16>, vector<128x128xbf16>, vector<8x128xf32> -> vector<8x128xf32>
    %c2_18 = arith.constant 2 : index
    %c0_19 = arith.constant 0 : index
    %c0_20 = arith.constant 0 : index
    %25 = vector.load %arg3[%c2_18, %c0_19, %c0_20] : memref<4x1x128xf32, #tpu.memory_space<vmem>>, vector<1x1x128xf32>
    %26 = vector.shape_cast %25 : vector<1x1x128xf32> to vector<1x128xf32>
    %27 = vector.broadcast %26 : vector<1x128xf32> to vector<8x128xf32>
    %28 = arith.addf %24, %27 : vector<8x128xf32>
    %cst_21 = arith.constant 0.000000e+00 : f32
    %29 = vector.broadcast %cst_21 : f32 to vector<8x128xf32>
    %30 = arith.maximumf %28, %29 : vector<8x128xf32>
    %31 = arith.truncf %30 : vector<8x128xf32> to vector<8x128xbf16>
    %c3 = arith.constant 3 : index
    %c0_22 = arith.constant 0 : index
    %c0_23 = arith.constant 0 : index
    %32 = vector.load %arg2[%c3, %c0_22, %c0_23] : memref<4x128x128xbf16, #tpu.memory_space<vmem>>, vector<1x128x128xbf16>
    %33 = vector.shape_cast %32 : vector<1x128x128xbf16> to vector<128x128xbf16>
    %cst_24 = arith.constant dense<0.000000e+00> : vector<8x128xf32>
    %34 = tpu.matmul %31, %33, %cst_24 {dimension_numbers = #tpu.dot_dimension_numbers<[1], [0], [0], [1], [0, 0, 1, 1], [], []>} : vector<8x128xbf16>, vector<128x128xbf16>, vector<8x128xf32> -> vector<8x128xf32>
    %c3_25 = arith.constant 3 : index
    %c0_26 = arith.constant 0 : index
    %c0_27 = arith.constant 0 : index
    %35 = vector.load %arg3[%c3_25, %c0_26, %c0_27] : memref<4x1x128xf32, #tpu.memory_space<vmem>>, vector<1x1x128xf32>
    %36 = vector.shape_cast %35 : vector<1x1x128xf32> to vector<1x128xf32>
    %37 = vector.broadcast %36 : vector<1x128xf32> to vector<8x128xf32>
    %38 = arith.addf %34, %37 : vector<8x128xf32>
    %cst_28 = arith.constant dense<0xFF800000> : vector<8xf32>
    %39 = vector.multi_reduction <maximumf>, %38, %cst_28 [1] : vector<8x128xf32> to vector<8xf32>
    %40 = vector.shape_cast %39 : vector<8xf32> to vector<8x1xf32>
    %41 = vector.broadcast %40 : vector<8x1xf32> to vector<8x128xf32>
    %42 = arith.subf %38, %41 : vector<8x128xf32>
    %43 = math.exp %42 : vector<8x128xf32>
    %cst_29 = arith.constant dense<0.000000e+00> : vector<8xf32>
    %44 = vector.multi_reduction <add>, %43, %cst_29 [1] : vector<8x128xf32> to vector<8xf32>
    %45 = vector.shape_cast %44 : vector<8xf32> to vector<8x1xf32>
    %46 = tpu.reciprocal %45 {approx = true} : vector<8x1xf32> -> vector<8x1xf32>
    %47 = vector.broadcast %46 : vector<8x1xf32> to vector<8x128xf32>
    %48 = arith.mulf %43, %47 : vector<8x128xf32>
    %c0_30 = arith.constant 0 : index
    %c0_31 = arith.constant 0 : index
    %49 = vector.load %arg4[%c0_30, %c0_31] : memref<8x128xf32, #tpu.memory_space<vmem>>, vector<8x128xf32>
    tpu.vector_store %arg4[%c0_30, %c0_31], %48 {strides = array<i32>} : memref<8x128xf32, #tpu.memory_space<vmem>>, vector<8x128xf32>,
    return
  }
  func.func @transform_0(%arg0: i32) -> (i32, i32) {
    %c0_i32 = arith.constant 0 : i32
    %c0_i32_0 = arith.constant 0 : i32
    return %arg0, %c0_i32 : i32, i32
  }
  func.func @transform_1(%arg0: i32) -> (i32, i32, i32) {
    %c0_i32 = arith.constant 0 : i32
    %c0_i32_0 = arith.constant 0 : i32
    %c0_i32_1 = arith.constant 0 : i32
    %c0_i32_2 = arith.constant 0 : i32
    return %c0_i32, %c0_i32_0, %c0_i32_1 : i32, i32, i32
  }
  func.func @transform_2(%arg0: i32) -> (i32, i32, i32) {
    %c0_i32 = arith.constant 0 : i32
    %c0_i32_0 = arith.constant 0 : i32
    %c0_i32_1 = arith.constant 0 : i32
    %c0_i32_2 = arith.constant 0 : i32
    return %c0_i32, %c0_i32_0, %c0_i32_1 : i32, i32, i32
  }
  func.func @transform_3(%arg0: i32) -> (i32, i32) {
    %c0_i32 = arith.constant 0 : i32
    %c0_i32_0 = arith.constant 0 : i32
    return %arg0, %c0_i32 : i32, i32
  }
}

</mosaic_0001>

<llo_original>
// kernel: _mlp_forward_impl.1
$region0: #{_mlp_forward_impl.1}
  #allocation0 [shape = 'u32[]', space=smem, size = 0x4, offset = 0x4, fixed_abs, tag = 'smem constant byte address 0x4 - core index']
  #allocation1 [shape = 'u32[144,128]{1,0:T(1,128)}', space=vmem, size = 0x12000, scoped, tag = 'internal scratch']
  %s0 = inlined_call_operand.hbm [shape: f32[8,16], index: 0, kind: input, shape index: {}]
  %s1 = inlined_call_operand.hbm [shape: bf16[4,128,128], index: 1, kind: input, shape index: {}]
  %s2 = inlined_call_operand.vmem [shape: f32[4,1,128], index: 2, kind: input, shape index: {}]
  %s3 = inlined_call_operand.vmem [shape: f32[8,128], index: 3, kind: output, shape index: {}]
  %s4 = sld [smem:[#allocation0]]
  $region30: #{_mlp_forward_impl.1} parent=0
    _
  %s6 = ssub.s32 1, %s4
  %s7 = scalar_select 0, %s6, %s4
  $region1: #{_mlp_forward_impl.1} parent=0
    #allocation2 [shape = 'u8[4096]{0}', space=vmem, size = 0x1000, scoped, tag = 'input window, operand 0, single buffered']
    #allocation3 [shape = 's32[1]{0}', space=sflag, size = 0x4, scoped, tag = 'scoped memory for _mlp_forward_impl.1']
    #allocation4 [shape = 'u8[131072]{0}', space=vmem, size = 0x20000, scoped, tag = 'input window, operand 1, single buffered']
    #allocation5 [shape = 's32[1]{0}', space=sflag, size = 0x4, scoped, tag = 'scoped memory for _mlp_forward_impl.1']
    %8 = vsyncpa [#allocation3], 0
    %9 = vsyncpa [#allocation5], 0
    // Predicated region
    $region2: #{_mlp_forward_impl.1} parent=1 // pred_check
      _
    $region3: #{_mlp_forward_impl.1} parent=1 // pred_check_branch
      %11 = sbr.rel (0) target = $region5
    $region4: #{_mlp_forward_impl.1} parent=1 // pred_region
      %s13 = ssub.s32 128, 128
      %14 = vsyncadd [#allocation3], %s13
      %s16 = sshll.u32 [#allocation2], 4
      %s17 = int_to_ptr.vmem [resolvable:$true] %s16
      %19 = dma.hbm_to_vmem [thread:$0]  %s0, 128, %s17, [#allocation3]
    $region5: #{_mlp_forward_impl.1} parent=1 // pred_fallthru
      _
    // Predicated region
    $region6: #{_mlp_forward_impl.1} parent=1 // pred_check
      _
    $region7: #{_mlp_forward_impl.1} parent=1 // pred_check_branch
      %21 = sbr.rel (0) target = $region9
    $region8: #{_mlp_forward_impl.1} parent=1 // pred_region
      %s23 = ssub.s32 4096, 4096
      %24 = vsyncadd [#allocation5], %s23
      %s25 = sshll.u32 [#allocation4], 4
      %s26 = int_to_ptr.vmem [resolvable:$true] %s25
      %31 = dma.hbm_to_vmem [thread:$0]  %s1, 4096, %s26, [#allocation5], 64, 64, 4
    $region9: #{_mlp_forward_impl.1} parent=1 // pred_fallthru
      _
    // Predicated region
    $region10: #{_mlp_forward_impl.1} parent=1 // pred_check
      _
    $region11: #{_mlp_forward_impl.1} parent=1 // pred_check_branch
      %33 = sbr.rel (0) target = $region13
    $region12: #{_mlp_forward_impl.1} parent=1 // pred_region
      _
    $region13: #{_mlp_forward_impl.1} parent=1 // pred_fallthru
      _
    // Predicated region
    $region14: #{_mlp_forward_impl.1} parent=1 // pred_check
      _
    $region15: #{_mlp_forward_impl.1} parent=1 // pred_check_branch
      %35 = sbr.rel (0) target = $region17
    $region16: #{_mlp_forward_impl.1} parent=1 // pred_region
      %36 = dma.done [#allocation3], 128
    $region17: #{_mlp_forward_impl.1} parent=1 // pred_fallthru
      _
    // Predicated region
    $region18: #{_mlp_forward_impl.1} parent=1 // pred_check
      _
    $region19: #{_mlp_forward_impl.1} parent=1 // pred_check_branch
      %38 = sbr.rel (0) target = $region21
    $region20: #{_mlp_forward_impl.1} parent=1 // pred_region
      %39 = dma.done [#allocation5], 4096
    $region21: #{_mlp_forward_impl.1} parent=1 // pred_fallthru
      _
    %v41 = vld [vmem:[#allocation2] sm:$0xff]
    %v42 = vpack.c.bf16 %v41, %v41
    %v43 = vld [vmem:[#allocation4] sm:$0xf]
    %v44 = vld [vmem:[#allocation4 + $0x4] sm:$0xf]
    %v45 = vld [vmem:[%s2] sm:$0x1]
    %v47 = vlaneseq
    %v48 = vshrl.u32 %v47, 7
    %v49 = vsub.s32 0, %v48
    %v50 = vrot.slane %v45, %v49
    %v54 = vunpack.c.l.b16 %v43
    %v55 = vunpack.c.l.b16 %v44
    %v56 = vpack.c.b16 %v55, %v54
    %vm58 = vcmask 130048
    %v60 = vsel %vm58, %v42, 0
    %62 = vmatprep.subr.bf16.mxu0 0
    %63 = vmatpush1.bf16.msra.mxu0 %v56
    %64 = vmatprep.subr.bf16.mxu0 0
    %65 = vmatpush1.bf16.msra.mxu0 0
    %66 = vmatprep.subr.bf16.mxu0 0
    %67 = vmatpush1.bf16.msra.mxu0 0
    %68 = vmatprep.subr.bf16.mxu0 0
    %69 = vmatpush1.bf16.msra.mxu0 0
    %70 = vmatprep.subr.bf16.mxu0 0
    %71 = vmatpush1.bf16.msra.mxu0 0
    %72 = vmatprep.subr.bf16.mxu0 0
    %73 = vmatpush1.bf16.msra.mxu0 0
    %74 = vmatprep.subr.bf16.mxu0 0
    %75 = vmatpush1.bf16.msra.mxu0 0
    %76 = vmatprep.subr.bf16.mxu0 0
    %77 = vmatpush1.bf16.msra.mxu0 0
    %78 = vmatprep.subr.bf16.mxu0 0
    %79 = vmatpush1.bf16.msra.mxu0 0
    %80 = vmatprep.subr.bf16.mxu0 0
    %81 = vmatpush1.bf16.msra.mxu0 0
    %82 = vmatprep.subr.bf16.mxu0 0
    %83 = vmatpush1.bf16.msra.mxu0 0
    %84 = vmatprep.subr.bf16.mxu0 0
    %85 = vmatpush1.bf16.msra.mxu0 0
    %86 = vmatprep.subr.bf16.mxu0 0
    %87 = vmatpush1.bf16.msra.mxu0 0
    %88 = vmatprep.subr.bf16.mxu0 0
    %89 = vmatpush1.bf16.msra.mxu0 0
    %90 = vmatprep.subr.bf16.mxu0 0
    %91 = vmatpush1.bf16.msra.mxu0 0
    %92 = vmatprep.subr.bf16.mxu0 0
    %93 = vmatpush1.bf16.msra.mxu0 0
    %94 = vmatprep.mubr.bf16.mxu0 0
    %95 = vmatmul.mubr.bf16.gmra.mrb[0].mxu0 %v60
    %v96 = vpop.f32.mrb[0].mxu0
    %v97 = vadd.f32 %v50, %v96
    %v98 = vpop.f32.mrb[0].mxu0
    %v99 = vpop.f32.mrb[0].mxu0
    %v100 = vpop.f32.mrb[0].mxu0
    %101 = vdwg.mxu0
    %v102 = vmax.f32 %v97, 0.0
    %v103 = vpack.c.bf16 %v102, %v102
    %s104 = scalar_lea.vmem [#allocation4], 64
    %v105 = vld [vmem:[%s104] sm:$0xf]
    %v106 = vld [vmem:[%s104 + $0x4] sm:$0xf]
    %v107 = vld [vmem:[%s104 + $0x8] sm:$0xf]
    %v108 = vld [vmem:[%s104 + $0xc] sm:$0xf]
    %v109 = vld [vmem:[%s104 + $0x10] sm:$0xf]
    %v110 = vld [vmem:[%s104 + $0x14] sm:$0xf]
    %v111 = vld [vmem:[%s104 + $0x18] sm:$0xf]
    %v112 = vld [vmem:[%s104 + $0x1c] sm:$0xf]
    %v113 = vld [vmem:[%s104 + $0x20] sm:$0xf]
    %v114 = vld [vmem:[%s104 + $0x24] sm:$0xf]
    %v115 = vld [vmem:[%s104 + $0x28] sm:$0xf]
    %v116 = vld [vmem:[%s104 + $0x2c] sm:$0xf]
    %v117 = vld [vmem:[%s104 + $0x30] sm:$0xf]
    %v118 = vld [vmem:[%s104 + $0x34] sm:$0xf]
    %v119 = vld [vmem:[%s104 + $0x38] sm:$0xf]
    %v120 = vld [vmem:[%s104 + $0x3c] sm:$0xf]
    %s121 = scalar_lea.vmem %s2, 1
    %v122 = vld [vmem:[%s121] sm:$0x1]
    %v124 = vlaneseq
    %v125 = vshrl.u32 %v124, 7
    %v126 = vsub.s32 0, %v125
    %v127 = vrot.slane %v122, %v126
    %v145 = vunpack.c.l.b16 %v105
    %v146 = vunpack.c.l.b16 %v106
    %v147 = vunpack.c.l.b16 %v107
    %v148 = vunpack.c.l.b16 %v108
    %v149 = vunpack.c.l.b16 %v109
    %v150 = vunpack.c.l.b16 %v110
    %v151 = vunpack.c.l.b16 %v111
    %v152 = vunpack.c.l.b16 %v112
    %v153 = vunpack.c.l.b16 %v113
    %v154 = vunpack.c.l.b16 %v114
    %v155 = vunpack.c.l.b16 %v115
    %v156 = vunpack.c.l.b16 %v116
    %v157 = vunpack.c.l.b16 %v117
    %v158 = vunpack.c.l.b16 %v118
    %v159 = vunpack.c.l.b16 %v119
    %v160 = vunpack.c.l.b16 %v120
    %v161 = vpack.c.b16 %v146, %v145
    %v162 = vpack.c.b16 %v148, %v147
    %v163 = vpack.c.b16 %v150, %v149
    %v164 = vpack.c.b16 %v152, %v151
    %v165 = vpack.c.b16 %v154, %v153
    %v166 = vpack.c.b16 %v156, %v155
    %v167 = vpack.c.b16 %v158, %v157
    %v168 = vpack.c.b16 %v160, %v159
    %177 = vmatprep.subr.bf16.mxu0 0
    %178 = vmatpush1.bf16.msra.mxu0 %v161
    %179 = vmatprep.subr.bf16.mxu0 0
    %180 = vmatpush1.bf16.msra.mxu0 %v162
    %181 = vmatprep.subr.bf16.mxu0 0
    %182 = vmatpush1.bf16.msra.mxu0 %v163
    %183 = vmatprep.subr.bf16.mxu0 0
    %184 = vmatpush1.bf16.msra.mxu0 %v164
    %185 = vmatprep.subr.bf16.mxu0 0
    %186 = vmatpush1.bf16.msra.mxu0 %v165
    %187 = vmatprep.subr.bf16.mxu0 0
    %188 = vmatpush1.bf16.msra.mxu0 %v166
    %189 = vmatprep.subr.bf16.mxu0 0
    %190 = vmatpush1.bf16.msra.mxu0 %v167
    %191 = vmatprep.subr.bf16.mxu0 0
    %192 = vmatpush1.bf16.msra.mxu0 %v168
    %193 = vmatprep.subr.bf16.mxu0 0
    %194 = vmatpush1.bf16.msra.mxu0 0
    %195 = vmatprep.subr.bf16.mxu0 0
    %196 = vmatpush1.bf16.msra.mxu0 0
    %197 = vmatprep.subr.bf16.mxu0 0
    %198 = vmatpush1.bf16.msra.mxu0 0
    %199 = vmatprep.subr.bf16.mxu0 0
    %200 = vmatpush1.bf16.msra.mxu0 0
    %201 = vmatprep.subr.bf16.mxu0 0
    %202 = vmatpush1.bf16.msra.mxu0 0
    %203 = vmatprep.subr.bf16.mxu0 0
    %204 = vmatpush1.bf16.msra.mxu0 0
    %205 = vmatprep.subr.bf16.mxu0 0
    %206 = vmatpush1.bf16.msra.mxu0 0
    %207 = vmatprep.subr.bf16.mxu0 0
    %208 = vmatpush1.bf16.msra.mxu0 0
    %209 = vmatprep.mubr.bf16.mxu0 0
    %210 = vmatmul.mubr.bf16.gmra.mrb[0].mxu0 %v103
    %v211 = vpop.f32.mrb[0].mxu0
    %v212 = vadd.f32 %v127, %v211
    %v213 = vpop.f32.mrb[0].mxu0
    %v214 = vpop.f32.mrb[0].mxu0
    %v215 = vpop.f32.mrb[0].mxu0
    %216 = vdwg.mxu0
    %v217 = vmax.f32 %v212, 0.0
    %v218 = vpack.c.bf16 %v217, %v217
    %s219 = scalar_lea.vmem [#allocation4], 128
    %v220 = vld [vmem:[%s219] sm:$0xf]
    %v221 = vld [vmem:[%s219 + $0x4] sm:$0xf]
    %v222 = vld [vmem:[%s219 + $0x8] sm:$0xf]
    %v223 = vld [vmem:[%s219 + $0xc] sm:$0xf]
    %v224 = vld [vmem:[%s219 + $0x10] sm:$0xf]
    %v225 = vld [vmem:[%s219 + $0x14] sm:$0xf]
    %v226 = vld [vmem:[%s219 + $0x18] sm:$0xf]
    %v227 = vld [vmem:[%s219 + $0x1c] sm:$0xf]
    %v228 = vld [vmem:[%s219 + $0x20] sm:$0xf]
    %v229 = vld [vmem:[%s219 + $0x24] sm:$0xf]
    %v230 = vld [vmem:[%s219 + $0x28] sm:$0xf]
    %v231 = vld [vmem:[%s219 + $0x2c] sm:$0xf]
    %v232 = vld [vmem:[%s219 + $0x30] sm:$0xf]
    %v233 = vld [vmem:[%s219 + $0x34] sm:$0xf]
    %v234 = vld [vmem:[%s219 + $0x38] sm:$0xf]
    %v235 = vld [vmem:[%s219 + $0x3c] sm:$0xf]
    %s236 = scalar_lea.vmem %s2, 2
    %v237 = vld [vmem:[%s236] sm:$0x1]
    %v239 = vlaneseq
    %v240 = vshrl.u32 %v239, 7
    %v241 = vsub.s32 0, %v240
    %v242 = vrot.slane %v237, %v241
    %v260 = vunpack.c.l.b16 %v220
    %v261 = vunpack.c.l.b16 %v221
    %v262 = vunpack.c.l.b16 %v222
    %v263 = vunpack.c.l.b16 %v223
    %v264 = vunpack.c.l.b16 %v224
    %v265 = vunpack.c.l.b16 %v225
    %v266 = vunpack.c.l.b16 %v226
    %v267 = vunpack.c.l.b16 %v227
    %v268 = vunpack.c.l.b16 %v228
    %v269 = vunpack.c.l.b16 %v229
    %v270 = vunpack.c.l.b16 %v230
    %v271 = vunpack.c.l.b16 %v231
    %v272 = vunpack.c.l.b16 %v232
    %v273 = vunpack.c.l.b16 %v233
    %v274 = vunpack.c.l.b16 %v234
    %v275 = vunpack.c.l.b16 %v235
    %v276 = vpack.c.b16 %v261, %v260
    %v277 = vpack.c.b16 %v263, %v262
    %v278 = vpack.c.b16 %v265, %v264
    %v279 = vpack.c.b16 %v267, %v266
    %v280 = vpack.c.b16 %v269, %v268
    %v281 = vpack.c.b16 %v271, %v270
    %v282 = vpack.c.b16 %v273, %v272
    %v283 = vpack.c.b16 %v275, %v274
    %292 = vmatprep.subr.bf16.mxu0 0
    %293 = vmatpush1.bf16.msra.mxu0 %v276
    %294 = vmatprep.subr.bf16.mxu0 0
    %295 = vmatpush1.bf16.msra.mxu0 %v277
    %296 = vmatprep.subr.bf16.mxu0 0
    %297 = vmatpush1.bf16.msra.mxu0 %v278
    %298 = vmatprep.subr.bf16.mxu0 0
    %299 = vmatpush1.bf16.msra.mxu0 %v279
    %300 = vmatprep.subr.bf16.mxu0 0
    %301 = vmatpush1.bf16.msra.mxu0 %v280
    %302 = vmatprep.subr.bf16.mxu0 0
    %303 = vmatpush1.bf16.msra.mxu0 %v281
    %304 = vmatprep.subr.bf16.mxu0 0
    %305 = vmatpush1.bf16.msra.mxu0 %v282
    %306 = vmatprep.subr.bf16.mxu0 0
    %307 = vmatpush1.bf16.msra.mxu0 %v283
    %308 = vmatprep.subr.bf16.mxu0 0
    %309 = vmatpush1.bf16.msra.mxu0 0
    %310 = vmatprep.subr.bf16.mxu0 0
    %311 = vmatpush1.bf16.msra.mxu0 0
    %312 = vmatprep.subr.bf16.mxu0 0
    %313 = vmatpush1.bf16.msra.mxu0 0
    %314 = vmatprep.subr.bf16.mxu0 0
    %315 = vmatpush1.bf16.msra.mxu0 0
    %316 = vmatprep.subr.bf16.mxu0 0
    %317 = vmatpush1.bf16.msra.mxu0 0
    %318 = vmatprep.subr.bf16.mxu0 0
    %319 = vmatpush1.bf16.msra.mxu0 0
    %320 = vmatprep.subr.bf16.mxu0 0
    %321 = vmatpush1.bf16.msra.mxu0 0
    %322 = vmatprep.subr.bf16.mxu0 0
    %323 = vmatpush1.bf16.msra.mxu0 0
    %324 = vmatprep.mubr.bf16.mxu0 0
    %325 = vmatmul.mubr.bf16.gmra.mrb[0].mxu0 %v218
    %v326 = vpop.f32.mrb[0].mxu0
    %v327 = vadd.f32 %v242, %v326
    %v328 = vpop.f32.mrb[0].mxu0
    %v329 = vpop.f32.mrb[0].mxu0
    %v330 = vpop.f32.mrb[0].mxu0
    %331 = vdwg.mxu0
    %v332 = vmax.f32 %v327, 0.0
    %v333 = vpack.c.bf16 %v332, %v332
    %s334 = scalar_lea.vmem [#allocation4], 192
    %v335 = vld [vmem:[%s334] sm:$0xf]
    %v336 = vld [vmem:[%s334 + $0x4] sm:$0xf]
    %v337 = vld [vmem:[%s334 + $0x8] sm:$0xf]
    %v338 = vld [vmem:[%s334 + $0xc] sm:$0xf]
    %v339 = vld [vmem:[%s334 + $0x10] sm:$0xf]
    %v340 = vld [vmem:[%s334 + $0x14] sm:$0xf]
    %v341 = vld [vmem:[%s334 + $0x18] sm:$0xf]
    %v342 = vld [vmem:[%s334 + $0x1c] sm:$0xf]
    %v343 = vld [vmem:[%s334 + $0x20] sm:$0xf]
    %v344 = vld [vmem:[%s334 + $0x24] sm:$0xf]
    %v345 = vld [vmem:[%s334 + $0x28] sm:$0xf]
    %v346 = vld [vmem:[%s334 + $0x2c] sm:$0xf]
    %v347 = vld [vmem:[%s334 + $0x30] sm:$0xf]
    %v348 = vld [vmem:[%s334 + $0x34] sm:$0xf]
    %v349 = vld [vmem:[%s334 + $0x38] sm:$0xf]
    %v350 = vld [vmem:[%s334 + $0x3c] sm:$0xf]
    %s351 = scalar_lea.vmem %s2, 3
    %v352 = vld [vmem:[%s351] sm:$0x1]
    %v354 = vlaneseq
    %v355 = vshrl.u32 %v354, 7
    %v356 = vsub.s32 0, %v355
    %v357 = vrot.slane %v352, %v356
    %v375 = vunpack.c.l.b16 %v335
    %v376 = vunpack.c.l.b16 %v336
    %v377 = vunpack.c.l.b16 %v337
    %v378 = vunpack.c.l.b16 %v338
    %v379 = vunpack.c.l.b16 %v339
    %v380 = vunpack.c.l.b16 %v340
    %v381 = vunpack.c.l.b16 %v341
    %v382 = vunpack.c.l.b16 %v342
    %v383 = vunpack.c.l.b16 %v343
    %v384 = vunpack.c.l.b16 %v344
    %v385 = vunpack.c.l.b16 %v345
    %v386 = vunpack.c.l.b16 %v346
    %v387 = vunpack.c.l.b16 %v347
    %v388 = vunpack.c.l.b16 %v348
    %v389 = vunpack.c.l.b16 %v349
    %v390 = vunpack.c.l.b16 %v350
    %v391 = vpack.c.b16 %v376, %v375
    %v392 = vpack.c.b16 %v378, %v377
    %v393 = vpack.c.b16 %v380, %v379
    %v394 = vpack.c.b16 %v382, %v381
    %v395 = vpack.c.b16 %v384, %v383
    %v396 = vpack.c.b16 %v386, %v385
    %v397 = vpack.c.b16 %v388, %v387
    %v398 = vpack.c.b16 %v390, %v389
    %407 = vmatprep.subr.bf16.mxu0 0
    %408 = vmatpush1.bf16.msra.mxu0 %v391
    %409 = vmatprep.subr.bf16.mxu0 0
    %410 = vmatpush1.bf16.msra.mxu0 %v392
    %411 = vmatprep.subr.bf16.mxu0 0
    %412 = vmatpush1.bf16.msra.mxu0 %v393
    %413 = vmatprep.subr.bf16.mxu0 0
    %414 = vmatpush1.bf16.msra.mxu0 %v394
    %415 = vmatprep.subr.bf16.mxu0 0
    %416 = vmatpush1.bf16.msra.mxu0 %v395
    %417 = vmatprep.subr.bf16.mxu0 0
    %418 = vmatpush1.bf16.msra.mxu0 %v396
    %419 = vmatprep.subr.bf16.mxu0 0
    %420 = vmatpush1.bf16.msra.mxu0 %v397
    %421 = vmatprep.subr.bf16.mxu0 0
    %422 = vmatpush1.bf16.msra.mxu0 %v398
    %423 = vmatprep.subr.bf16.mxu0 0
    %424 = vmatpush1.bf16.msra.mxu0 0
    %425 = vmatprep.subr.bf16.mxu0 0
    %426 = vmatpush1.bf16.msra.mxu0 0
    %427 = vmatprep.subr.bf16.mxu0 0
    %428 = vmatpush1.bf16.msra.mxu0 0
    %429 = vmatprep.subr.bf16.mxu0 0
    %430 = vmatpush1.bf16.msra.mxu0 0
    %431 = vmatprep.subr.bf16.mxu0 0
    %432 = vmatpush1.bf16.msra.mxu0 0
    %433 = vmatprep.subr.bf16.mxu0 0
    %434 = vmatpush1.bf16.msra.mxu0 0
    %435 = vmatprep.subr.bf16.mxu0 0
    %436 = vmatpush1.bf16.msra.mxu0 0
    %437 = vmatprep.subr.bf16.mxu0 0
    %438 = vmatpush1.bf16.msra.mxu0 0
    %439 = vmatprep.mubr.bf16.mxu0 0
    %440 = vmatmul.mubr.bf16.gmra.mrb[0].mxu0 %v333
    %v441 = vpop.f32.mrb[0].mxu0
    %v442 = vadd.f32 %v357, %v441
    %v443 = vpop.f32.mrb[0].mxu0
    %v444 = vpop.f32.mrb[0].mxu0
    %v445 = vpop.f32.mrb[0].mxu0
    %446 = vdwg.mxu0
    %447 = vmax.xlane.f32.xlu0 %v442
    %v448 = vpop.xlane.xlu0 %447
    %v449 = vsub.f32 %v442, %v448
    %v450 = vmul.f32 %v449, 1.442695
    %v451 = vpow.pop %v450
    %452 = vadd.xlane.f32.xlu0 %v451
    %v453 = vpop.xlane.xlu0 %452
    %v454 = vrcp.pop %v453
    %v455 = vmul.f32 %v451, %v454
    %456 = vst [vmem:[%s3] sm:$0xff] %v455
    // Predicated region
    $region22: #{_mlp_forward_impl.1} parent=1 // pred_check
      _
    $region23: #{_mlp_forward_impl.1} parent=1 // pred_check_branch
      %458 = sbr.rel (0) target = $region25
    $region24: #{_mlp_forward_impl.1} parent=1 // pred_region
      _
    $region25: #{_mlp_forward_impl.1} parent=1 // pred_fallthru
      _
    // Predicated region
    $region26: #{_mlp_forward_impl.1} parent=1 // pred_check
      _
    $region27: #{_mlp_forward_impl.1} parent=1 // pred_check_branch
      %460 = sbr.rel (0) target = $region29
    $region28: #{_mlp_forward_impl.1} parent=1 // pred_region
      _
    $region29: #{_mlp_forward_impl.1} parent=1 // pred_fallthru
      _
    %461 = vsyncpa [#allocation3], 1
    %462 = vsyncpa [#allocation5], 1

</llo_original>
